<compile_context>
chip_gen: v7x
topology: tpu7x:2x2x1
jax: 0.10.0
libtpu: 0.0.40
codegen_flags: <defaults>
</compile_context>

<pallas_src>
import functools

import numpy as np
import jax
import jax.numpy as jnp
from jax.experimental import pallas as pl
from jax.experimental.pallas import tpu as pltpu


def _round_up(x, m):
    return (x + m - 1) // m * m


# ----------------------------------------------------------------------------- kernel
def _edge_gumbel_softmax_kernel(*refs, C, temperature, eps, n_kp, apply_mask,
                                add_noise, has_logits, log_prior, n_valid, n_pad,
                                tile_r, out_dtype):
    """Fused gumbel-softmax over the class axis on dense [tile_r, 128] slabs.

    refs layout (all class-major, lane-dense):
      [logits_ref?]  [C, tile_r, 128]        (omitted on the constant-prior path)
      [noise_ref?]   [1 or C, tile_r, 128]   uniform(0,1) (omitted when add_noise=False)
      out_ref        [C, tile_r, 128]
    """
    idx = 0
    logits = None
    if has_logits:
        logits = refs[idx][...].astype(jnp.float32)
        idx += 1
    noise = None
    if add_noise:
        noise = refs[idx][...].astype(jnp.float32)
        idx += 1
    out_ref = refs[idx]

    i = pl.program_id(0)
    inv_t = 1.0 / temperature
    slab = (tile_r, 128)

    # Class-independent keep-mask: self-loop removal + zeroing of the padded tail.
    keep = None
    need_tail = n_pad != n_valid
    if apply_mask or need_tail:
        row = jax.lax.broadcasted_iota(jnp.int32, slab, 0)
        lane = jax.lax.broadcasted_iota(jnp.int32, slab, 1)
        e_idx = (i * tile_r + row) * 128 + lane          # flattened (B, n_kp, n_kp) index
        if apply_mask:
            rem = e_idx % (n_kp * n_kp)
            keep = (rem // n_kp) != (rem % n_kp)
        if need_tail:
            valid = e_idx < n_valid
            keep = valid if keep is None else (keep & valid)

    def class_logit(c):
        if has_logits:
            return logits[c]
        return jnp.full(slab, log_prior[c], dtype=jnp.float32)

    if C == 2:
        # Two-class closed form: softmax collapses to one sigmoid, and the difference
        # of two Gumbel samples is a single Logistic(0, 1) sample.
        d = class_logit(1) - class_logit(0)
        if add_noise:
            u = noise[0]
            d = d + (jnp.log(u + eps) - jnp.log(1.0 - u + eps))
        d = d * inv_t
        p1 = 1.0 / (1.0 + jnp.exp(-d))
        ps = [1.0 - p1, p1]
    else:
        ys = []
        for c in range(C):
            yc = class_logit(c)
            if add_noise:
                yc = yc - jnp.log(-jnp.log(noise[c] + eps) + eps)
            ys.append(yc * inv_t)
        m = ys[0]
        for c in range(1, C):
            m = jnp.maximum(m, ys[c])
        es = [jnp.exp(y - m) for y in ys]
        s = es[0]
        for c in range(1, C):
            s = s + es[c]
        inv_s = 1.0 / s
        ps = [e * inv_s for e in es]

    for c in range(C):
        pc = ps[c]
        if keep is not None:
            pc = jnp.where(keep, pc, 0.0)
        out_ref[c, :, :] = pc.astype(out_dtype)


# ------------------------------------------------------------------------------ driver
def _gumbel_softmax_class_major(key, *, logits_cm=None, log_prior=None, C=None, N=None,
                                temperature=0.5, eps=1e-10, n_kp=1,
                                mask_self_loop=False, add_noise=True,
                                out_dtype=jnp.float32):
    """Core fused kernel on class-major edges.

    Exactly one of:
      logits_cm : [C, N] array (classes major, edges on the fast axis)
      log_prior : length-C Python/numpy constants (constant-logit path for init_graph;
                  no logits tensor is ever materialized)
    Returns [C, N] probabilities.
    """
    has_logits = logits_cm is not None
    if has_logits:
        C, N = logits_cm.shape
    assert C is not None and N is not None

    # --- tiling: pack edges into [C, rows, 128] so every vreg is a dense (8,128) tile.
    R = pl.cdiv(N, 128)
    max_tile_r = max(256, 4096 // C)          # keep per-step footprint roughly constant
    if R <= 8:
        tile_r, steps = R, 1                  # single full-extent block (tiny problems)
    else:
        steps = max(2, -(-R // max_tile_r))   # >= 2 steps: v7x megacore shards 'parallel'
        tile_r = _round_up(-(-R // steps), 8)
    r_pad = tile_r * steps
    n_pad = r_pad * 128

    in_specs, args = [], []
    if has_logits:
        lg = logits_cm
        if n_pad != N:
            lg = jnp.pad(lg, ((0, 0), (0, n_pad - N)))
        lg = lg.reshape(C, r_pad, 128)
        in_specs.append(pl.BlockSpec((C, tile_r, 128), lambda i: (0, i, 0)))
        args.append(lg)
    if add_noise:
        noise_c = 1 if C == 2 else C          # logistic trick: one draw per edge for C==2
        u = jax.random.uniform(key, (noise_c, r_pad, 128), jnp.float32)
        in_specs.append(pl.BlockSpec((noise_c, tile_r, 128), lambda i: (0, i, 0)))
        args.append(u)

    kernel = functools.partial(
        _edge_gumbel_softmax_kernel, C=int(C), temperature=float(temperature),
        eps=float(eps), n_kp=int(n_kp), apply_mask=bool(mask_self_loop),
        add_noise=bool(add_noise), has_logits=has_logits,
        log_prior=None if log_prior is None else tuple(float(v) for v in log_prior),
        n_valid=int(N), n_pad=int(n_pad), tile_r=int(tile_r), out_dtype=out_dtype)

    out = pl.pallas_call(
        kernel,
        out_shape=jax.ShapeDtypeStruct((C, r_pad, 128), out_dtype),
        grid=(steps,),
        in_specs=in_specs,
        out_specs=pl.BlockSpec((C, tile_r, 128), lambda i: (0, i, 0)),
        compiler_params=pltpu.CompilerParams(dimension_semantics=("parallel",)),
    )(*args)

    out = out.reshape(C, n_pad)
    if n_pad != N:                            # no slice copy when N is 128-aligned
        out = out[:, :N]
    return out


# ------------------------------------------------------------------------------- glue
def _straight_through(y, mask=None):
    """Straight-through one-hot on the trailing class axis (non-hot path, pure JAX)."""
    C = y.shape[-1]
    y_hard = jax.nn.one_hot(jnp.argmax(y, axis=-1), C, dtype=y.dtype)
    if mask is not None:
        y_hard = y_hard * mask
    return jax.lax.stop_gradient(y_hard - y) + y


def gumbel_softmax(key, logits_nc, temperature=0.5, hard=False, *, n_kp=1,
                   mask_self_loop=False, add_noise=True):
    """Reference-compatible wrapper for [N, C] logits.

    Transposes at the boundary; prefer init_graph / infer_edge_type which feed the
    kernel class-major directly (no extra HBM passes)."""
    N, C = logits_nc.shape
    y = _gumbel_softmax_class_major(
        key, logits_cm=logits_nc.T, temperature=temperature, n_kp=n_kp,
        mask_self_loop=mask_self_loop, add_noise=add_noise).T
    if hard:
        mask = None
        if mask_self_loop:
            rem = jnp.arange(N) % (n_kp * n_kp)
            mask = ((rem // n_kp) != (rem % n_kp)).astype(y.dtype)[:, None]
        y = _straight_through(y, mask=mask)
    return y


def init_graph(key, B, n_kp, node_attr_dim, edge_attr_dim, edge_type_num, prior,
               hard=False):
    """DynaNetGNN.init_graph: prior -> log -> gumbel_softmax -> edge_type.

    `prior` is the config constant args.prior (numpy / Python sequence); log(prior) is
    baked into the kernel so no [N, C] logits tensor is materialized or DMA'd — the
    kernel only reads the noise stream and writes probabilities."""
    log_prior = np.log(np.asarray(prior, dtype=np.float64))
    C, N = int(edge_type_num), int(B * n_kp * n_kp)

    node_attr = jnp.zeros((B, n_kp, node_attr_dim), jnp.float32)
    edge_attr = jnp.zeros((B, n_kp, n_kp, edge_attr_dim), jnp.float32)

    y_cm = _gumbel_softmax_class_major(
        key, log_prior=log_prior, C=C, N=N, n_kp=n_kp, mask_self_loop=False)
    edge_type = jnp.moveaxis(y_cm.reshape(C, B, n_kp, n_kp), 0, -1)
    if hard:
        edge_type = _straight_through(edge_type)
    edge_type_logits = jnp.broadcast_to(
        jnp.asarray(log_prior, jnp.float32)[None, None, None, :], (B, n_kp, n_kp, C))
    return [node_attr, edge_attr, edge_type, edge_type_logits]


def infer_edge_type(key, edge_type_logits, edge_share=True, hard=False,
                    temperature=0.5):
    """graph_inference edge-type tail: symmetrize -> gumbel_softmax -> mask self-loops.

    edge_type_logits: [B, n_kp, n_kp, C].  The moveaxis to class-major fuses with the
    symmetrization copy that feeds the Pallas call; the self-loop mask lives in-kernel.
    """
    B, n_kp, _, C = edge_type_logits.shape
    if edge_share:
        edge_type_logits = (edge_type_logits
                            + jnp.swapaxes(edge_type_logits, 1, 2)) * 0.5
    logits_cm = jnp.moveaxis(edge_type_logits, -1, 0).reshape(C, B * n_kp * n_kp)
    y_cm = _gumbel_softmax_class_major(
        key, logits_cm=logits_cm, temperature=temperature, n_kp=n_kp,
        mask_self_loop=True)
    edge_type = jnp.moveaxis(y_cm.reshape(C, B, n_kp, n_kp), 0, -1)
    if hard:
        offdiag = (1.0 - jnp.eye(n_kp, dtype=edge_type.dtype))[None, :, :, None]
        edge_type = _straight_through(edge_type, mask=offdiag)
    return edge_type, edge_type_logits


# -------------------------------------------------------------------------------- main
if __name__ == "__main__":
    B, n_kp = 2, 8
    edge_type_num = 2
    node_attr_dim, edge_attr_dim = 4, 4
    prior = np.array([0.7, 0.3], np.float64)            # args.prior (config constant)

    key = jax.random.PRNGKey(0)
    k_init, k_logits, k_infer, k_chk = jax.random.split(key, 4)

    # --- init_graph path (constant-prior logits, no self-loop mask) ---
    graph = init_graph(k_init, B, n_kp, node_attr_dim, edge_attr_dim,
                       edge_type_num, prior)
    edge_type_init = jax.block_until_ready(graph[2])
    assert edge_type_init.shape == (B, n_kp, n_kp, edge_type_num)
    assert bool(jnp.all(jnp.isfinite(edge_type_init)))
    assert bool(jnp.allclose(edge_type_init.sum(-1), 1.0, atol=1e-5))

    # --- graph_inference edge-type tail (synthetic logits standing in for the
    #     undefined PropNet affinity output) ---
    logits = jax.random.normal(k_logits, (B, n_kp, n_kp, edge_type_num), jnp.float32)
    edge_type, sym_logits = infer_edge_type(k_infer, logits, edge_share=True)
    edge_type = jax.block_until_ready(edge_type)

    # structural invariants with noise on: self-loop rows zeroed, other rows sum to 1
    offdiag = ~jnp.eye(n_kp, dtype=bool)
    sums = edge_type.sum(-1)                             # [B, n_kp, n_kp]
    assert bool(jnp.allclose(jnp.where(offdiag[None], sums, 1.0), 1.0, atol=1e-5))
    assert bool(jnp.allclose(jnp.where(offdiag[None], 0.0, sums), 0.0, atol=1e-6))
    assert bool(jnp.all(edge_type >= 0.0)) and bool(jnp.all(edge_type <= 1.0))

    # deterministic check (noise off) of the fused kernel vs pure-JAX reference softmax
    C = edge_type_num
    flat_cm = jnp.moveaxis(sym_logits, -1, 0).reshape(C, B * n_kp * n_kp)
    det_cm = _gumbel_softmax_class_major(
        k_chk, logits_cm=flat_cm, temperature=0.5, n_kp=n_kp,
        mask_self_loop=True, add_noise=False)
    det_cm = jax.block_until_ready(det_cm)
    mask_rows = jnp.broadcast_to(
        (1.0 - jnp.eye(n_kp, dtype=jnp.float32))[None], (B, n_kp, n_kp)).reshape(1, -1)
    ref = jax.nn.softmax(flat_cm / 0.5, axis=0) * mask_rows
    assert bool(jnp.allclose(det_cm, ref, atol=1e-5, rtol=1e-5))

    # exercise the generic-C (C > 2) softmax path once
    logits4 = jax.random.normal(k_chk, (B, n_kp, n_kp, 4), jnp.float32)
    et4, _ = infer_edge_type(jax.random.fold_in(k_chk, 1), logits4, edge_share=True)
    et4 = jax.block_until_ready(et4)
    sums4 = et4.sum(-1)
    assert bool(jnp.allclose(jnp.where(offdiag[None], sums4, 1.0), 1.0, atol=1e-4))

    print("KERNEL_OK")
</pallas_src>

<mosaic_0001>
module attributes {stable_mosaic.version = 11 : i64} {
  func.func @_edge_gumbel_softmax_kernel(%arg0: i32, %arg1: memref<1x1x128xf32, #tpu.memory_space<vmem>>, %arg2: memref<2x1x128xf32, #tpu.memory_space<vmem>>) attributes {dimension_semantics = [#tpu.dimension_semantics<parallel>], iteration_bounds = array<i64: 1>, scalar_prefetch = 0 : i64, scratch_operands = 0 : i64, tpu.core_type = #tpu.core_type<tc>, window_params = [{transform_indices = @transform_0, window_bounds = array<i64: 1, 1, 128>}, {transform_indices = @transform_1, window_bounds = array<i64: 2, 1, 128>}]} {
    %c0 = arith.constant 0 : index
    %c0_0 = arith.constant 0 : index
    %c0_1 = arith.constant 0 : index
    %0 = vector.load %arg1[%c0, %c0_0, %c0_1] : memref<1x1x128xf32, #tpu.memory_space<vmem>>, vector<1x1x128xf32>
    %cst = arith.constant -1.20397282 : f32
    %1 = vector.broadcast %cst : f32 to vector<1x128xf32>
    %cst_2 = arith.constant -0.356674939 : f32
    %2 = vector.broadcast %cst_2 : f32 to vector<1x128xf32>
    %3 = arith.subf %1, %2 : vector<1x128xf32>
    %4 = vector.shape_cast %0 : vector<1x1x128xf32> to vector<1x128xf32>
    %cst_3 = arith.constant 1.000000e-10 : f32
    %5 = vector.broadcast %cst_3 : f32 to vector<1x128xf32>
    %6 = arith.addf %4, %5 : vector<1x128xf32>
    %7 = math.log %6 : vector<1x128xf32>
    %cst_4 = arith.constant 1.000000e+00 : f32
    %8 = vector.broadcast %cst_4 : f32 to vector<1x128xf32>
    %9 = arith.subf %8, %4 : vector<1x128xf32>
    %cst_5 = arith.constant 1.000000e-10 : f32
    %10 = vector.broadcast %cst_5 : f32 to vector<1x128xf32>
    %11 = arith.addf %9, %10 : vector<1x128xf32>
    %12 = math.log %11 : vector<1x128xf32>
    %13 = arith.subf %7, %12 : vector<1x128xf32>
    %14 = arith.addf %3, %13 : vector<1x128xf32>
    %cst_6 = arith.constant 2.000000e+00 : f32
    %15 = vector.broadcast %cst_6 : f32 to vector<1x128xf32>
    %16 = arith.mulf %14, %15 : vector<1x128xf32>
    %cst_7 = arith.constant 0.000000e+00 : f32
    %17 = vector.broadcast %cst_7 : f32 to vector<1x128xf32>
    %18 = arith.subf %17, %16 : vector<1x128xf32>
    %19 = math.exp %18 : vector<1x128xf32>
    %cst_8 = arith.constant 1.000000e+00 : f32
    %20 = vector.broadcast %cst_8 : f32 to vector<1x128xf32>
    %21 = arith.addf %20, %19 : vector<1x128xf32>
    %cst_9 = arith.constant 1.000000e+00 : f32
    %22 = vector.broadcast %cst_9 : f32 to vector<1x128xf32>
    %23 = arith.divf %22, %21 : vector<1x128xf32>
    %cst_10 = arith.constant 1.000000e+00 : f32
    %24 = vector.broadcast %cst_10 : f32 to vector<1x128xf32>
    %25 = arith.subf %24, %23 : vector<1x128xf32>
    %c0_11 = arith.constant 0 : index
    %c0_12 = arith.constant 0 : index
    %c0_13 = arith.constant 0 : index
    %26 = vector.load %arg2[%c0_11, %c0_12, %c0_13] : memref<2x1x128xf32, #tpu.memory_space<vmem>>, vector<1x1x128xf32>
    %27 = vector.shape_cast %26 : vector<1x1x128xf32> to vector<1x128xf32>
    %28 = vector.shape_cast %25 : vector<1x128xf32> to vector<1x1x128xf32>
    tpu.vector_store %arg2[%c0_11, %c0_12, %c0_13], %28 {strides = array<i32>} : memref<2x1x128xf32, #tpu.memory_space<vmem>>, vector<1x1x128xf32>,
    %c1 = arith.constant 1 : index
    %c0_14 = arith.constant 0 : index
    %c0_15 = arith.constant 0 : index
    %29 = vector.load %arg2[%c1, %c0_14, %c0_15] : memref<2x1x128xf32, #tpu.memory_space<vmem>>, vector<1x1x128xf32>
    %30 = vector.shape_cast %29 : vector<1x1x128xf32> to vector<1x128xf32>
    %31 = vector.shape_cast %23 : vector<1x128xf32> to vector<1x1x128xf32>
    tpu.vector_store %arg2[%c1, %c0_14, %c0_15], %31 {strides = array<i32>} : memref<2x1x128xf32, #tpu.memory_space<vmem>>, vector<1x1x128xf32>,
    return
  }
  func.func @transform_0(%arg0: i32) -> (i32, i32, i32) {
    %c0_i32 = arith.constant 0 : i32
    %c0_i32_0 = arith.constant 0 : i32
    %c0_i32_1 = arith.constant 0 : i32
    return %c0_i32, %arg0, %c0_i32_0 : i32, i32, i32
  }
  func.func @transform_1(%arg0: i32) -> (i32, i32, i32) {
    %c0_i32 = arith.constant 0 : i32
    %c0_i32_0 = arith.constant 0 : i32
    %c0_i32_1 = arith.constant 0 : i32
    return %c0_i32, %arg0, %c0_i32_0 : i32, i32, i32
  }
}

</mosaic_0001>

<llo_original>
// kernel: tpu_custom_call.1
$region0: #{tpu_custom_call.1}
  #allocation0 [shape = 'u32[]', space=smem, size = 0x4, offset = 0x4, fixed_abs, tag = 'smem constant byte address 0x4 - core index']
  #allocation1 [shape = 'u32[144,128]{1,0:T(1,128)}', space=vmem, size = 0x12000, scoped, tag = 'internal scratch']
  %s0 = inlined_call_operand.hbm [shape: f32[1,1,128], index: 0, kind: input, shape index: {}]
  %s1 = inlined_call_operand.hbm [shape: f32[2,1,128], index: 1, kind: output, shape index: {}]
  %s2 = sld [smem:[#allocation0]]
  $region18: #{tpu_custom_call.1} parent=0
    _
  %s4 = ssub.s32 1, %s2
  %s5 = scalar_select 0, %s4, %s2
  $region1: #{tpu_custom_call.1} parent=0
    #allocation2 [shape = 'u8[512]{0}', space=vmem, size = 0x400, scoped, tag = 'input window, operand 0, single buffered']
    #allocation3 [shape = 's32[1]{0}', space=sflag, size = 0x4, scoped, tag = 'scoped memory for tpu_custom_call.1']
    #allocation4 [shape = 's32[1]{0}', space=sflag, size = 0x4, scoped, tag = 'scoped memory for tpu_custom_call.1']
    #allocation5 [shape = 'u8[1024]{0}', space=vmem, size = 0x400, scoped, tag = 'output window, operand 0, single buffered']
    %6 = vsyncpa [#allocation3], 0
    %7 = vsyncpa [#allocation4], 0
    // Predicated region
    $region2: #{tpu_custom_call.1} parent=1 // pred_check
      _
    $region3: #{tpu_custom_call.1} parent=1 // pred_check_branch
      %9 = sbr.rel (0) target = $region5
    $region4: #{tpu_custom_call.1} parent=1 // pred_region
      %s11 = ssub.s32 16, 16
      %12 = vsyncadd [#allocation3], %s11
      %s14 = sshll.u32 [#allocation2], 4
      %s15 = int_to_ptr.vmem [resolvable:$true] %s14
      %17 = dma.hbm_to_vmem [thread:$0]  %s0, 16, %s15, [#allocation3]
    $region5: #{tpu_custom_call.1} parent=1 // pred_fallthru
      _
    // Predicated region
    $region6: #{tpu_custom_call.1} parent=1 // pred_check
      _
    $region7: #{tpu_custom_call.1} parent=1 // pred_check_branch
      %19 = sbr.rel (0) target = $region9
    $region8: #{tpu_custom_call.1} parent=1 // pred_region
      %20 = dma.done [#allocation3], 16
    $region9: #{tpu_custom_call.1} parent=1 // pred_fallthru
      _
    %v21 = vld [vmem:[#allocation2] sm:$0x1]
    %v22 = vadd.f32 %v21, 1e-10
    %v23 = vlog2.pop %v22
    %v24 = vmul.f32 %v23, 0.6931472
    %v25 = vsub.f32 1.0, %v21
    %v26 = vadd.f32 %v25, 1e-10
    %v27 = vlog2.pop %v26
    %v28 = vmul.f32 %v27, 0.6931472
    %v29 = vsub.f32 %v24, %v28
    %v30 = vadd.f32 %v29, -0.8472979
    %v31 = vmul.f32 %v30, 2.0
    %v32 = vsub.f32 0.0, %v31
    %v33 = vmul.f32 %v32, 1.442695
    %v34 = vpow.pop %v33
    %v35 = vadd.f32 %v34, 1.0
    %v36 = vrcp.pop %v35
    %v37 = vmul.f32 1.0, %v36
    %v38 = vsub.f32 1.0, %v37
    %39 = vst [vmem:[#allocation5] sm:$0x1] %v38
    %s40 = scalar_lea.vmem [#allocation5], 1
    %41 = vst [vmem:[%s40] sm:$0x1] %v37
    // Predicated region
    $region10: #{tpu_custom_call.1} parent=1 // pred_check
      _
    $region11: #{tpu_custom_call.1} parent=1 // pred_check_branch
      %43 = sbr.rel (0) target = $region13
    $region12: #{tpu_custom_call.1} parent=1 // pred_region
      %s45 = ssub.s32 32, 32
      %46 = vsyncadd [#allocation4], %s45
      %s47 = sshll.u32 [#allocation5], 4
      %s48 = int_to_ptr.vmem [resolvable:$true] %s47
      %53 = dma.vmem_to_hbm [thread:$0]  %s48, 32, %s1, [#allocation4], 16, 16, 1
    $region13: #{tpu_custom_call.1} parent=1 // pred_fallthru
      _
    // Predicated region
    $region14: #{tpu_custom_call.1} parent=1 // pred_check
      _
    $region15: #{tpu_custom_call.1} parent=1 // pred_check_branch
      %55 = sbr.rel (0) target = $region17
    $region16: #{tpu_custom_call.1} parent=1 // pred_region
      %56 = dma.done [#allocation4], 32
    $region17: #{tpu_custom_call.1} parent=1 // pred_fallthru
      _
    %57 = vsyncpa [#allocation3], 1
    %58 = vsyncpa [#allocation4], 1

</llo_original>
